<compile_context>
chip_gen: v7x
topology: tpu7x:2x2x1
jax: 0.10.0
libtpu: 0.0.40
codegen_flags: <defaults>
</compile_context>

<pallas_src>
import functools

import jax
import jax.numpy as jnp
from jax import lax
from jax.experimental import pallas as pl
from jax.experimental.pallas import tpu as pltpu


def _make_shift_stack(H, dtype):
    """(2H, H) stacked 0/1 matrices: rows [0:H] select x[h-1], rows [H:2H]
    select x[h+1]; out-of-image rows are all-zero (SAME-padding boundary)."""
    r = lax.broadcasted_iota(jnp.int32, (H, H), 0)
    c = lax.broadcasted_iota(jnp.int32, (H, H), 1)
    s_prev = (r == c + 1).astype(dtype)   # (s_prev @ x)[h] = x[h-1], zero row at h=0
    s_next = (r + 1 == c).astype(dtype)   # (s_next @ x)[h] = x[h+1], zero row at h=H-1
    return jnp.concatenate([s_prev, s_next], axis=0)


def stnet_kernel(x_ref, shift_ref, w1_ref, b1_ref, w2_ref, b2_ref, o_ref, *, H):
    x = x_ref[...]            # (H, W*C), lane-dense f32
    s = shift_ref[...]        # (2H, H): prev-row selector stacked over next-row selector

    def conv3x3(v, w_ref):
        # One MXU matmul produces both shifted views; halves are 8-sublane aligned.
        shifted = jnp.dot(s, v, preferred_element_type=jnp.float32)   # (2H, W*C)
        v_prev = shifted[:H]                                          # rows: v[h-1]
        v_next = shifted[H:]                                          # rows: v[h+1]
        acc = jnp.dot(v_prev, w_ref[0], preferred_element_type=jnp.float32)
        acc = acc + jnp.dot(v, w_ref[1], preferred_element_type=jnp.float32)
        acc = acc + jnp.dot(v_next, w_ref[2], preferred_element_type=jnp.float32)
        return acc

    # layer 1: conv3x3 + bias + ReLU (intermediate stays in registers; no scratch)
    h = jnp.maximum(conv3x3(x, w1_ref) + b1_ref[...], 0.0)
    # layer 2: conv3x3 + bias
    y = conv3x3(h, w2_ref) + b2_ref[...]
    o_ref[...] = y.astype(o_ref.dtype)    # full 128-lane unmasked store


def _conv_to_row_operator(w, W):
    """Fold the kw taps (and the W-boundary zeroing) of a 3x3 HWIO conv weight
    into three (W*C, W*C) matrices acting on rows laid out as (w, c) -> w*C + c."""
    C = w.shape[2]
    mats = []
    for dy in range(3):
        m = jnp.zeros((W, C, W, C), jnp.float32)
        for dx in range(3):
            # band[w_in, w_out] = 1 iff w_in == w_out + dx - 1 (zero outside image)
            band = jnp.eye(W, k=1 - dx, dtype=jnp.float32)
            m = m + jnp.einsum("ab,ij->aibj", band, w[dy, dx])
        mats.append(m.reshape(W * C, W * C))
    return jnp.stack(mats, axis=0)        # (3, W*C, W*C)


def ode_func_forward(t, x_nchw, params):
    """Pallas implementation of ODEFunc.forward(t, x) == stnet(x)."""
    del t  # ODEFunc ignores t; self.nfe is host-side Python state (no tensor op).
    w1, b1, w2, b2 = params
    N, C, H, W = x_nchw.shape
    WC = W * C

    # NCHW -> lane-dense (N, H, W*C).  No spatial padding: boundaries are
    # handled inside the kernel, so no extra HBM round trip per RHS evaluation.
    x = jnp.transpose(x_nchw, (0, 2, 3, 1)).reshape(N, H, WC)

    shift = _make_shift_stack(H, x.dtype)            # (2H, H), built once on host
    wb1 = _conv_to_row_operator(w1, W)               # (3, WC, WC)
    wb2 = _conv_to_row_operator(w2, W)
    bb1 = jnp.tile(b1, W).reshape(1, WC)             # bias broadcast over the w axis
    bb2 = jnp.tile(b2, W).reshape(1, WC)

    kernel = functools.partial(stnet_kernel, H=H)

    out = pl.pallas_call(
        kernel,
        out_shape=jax.ShapeDtypeStruct((N, H, WC), x.dtype),
        grid_spec=pltpu.PrefetchScalarGridSpec(
            num_scalar_prefetch=0,
            grid=(N,),   # one sample per step; 2-way parallel keeps both v7x TCs busy
            in_specs=[
                pl.BlockSpec((None, H, WC), lambda n: (n, 0, 0)),   # activation tile
                pl.BlockSpec((2 * H, H), lambda n: (0, 0)),          # resident shift op
                pl.BlockSpec((3, WC, WC), lambda n: (0, 0, 0)),      # resident weights 1
                pl.BlockSpec((1, WC), lambda n: (0, 0)),             # resident bias 1
                pl.BlockSpec((3, WC, WC), lambda n: (0, 0, 0)),      # resident weights 2
                pl.BlockSpec((1, WC), lambda n: (0, 0)),             # resident bias 2
            ],
            out_specs=pl.BlockSpec((None, H, WC), lambda n: (n, 0, 0)),
        ),
        compiler_params=pltpu.CompilerParams(dimension_semantics=("parallel",)),
    )(x, shift, wb1, bb1, wb2, bb2)

    return jnp.transpose(out.reshape(N, H, W, C), (0, 3, 1, 2))   # back to NCHW


def stnet_reference(x_nchw, params):
    """Plain-JAX reference (same semantics) for correctness checking."""
    w1, b1, w2, b2 = params
    x = jnp.transpose(x_nchw, (0, 2, 3, 1))

    def conv(v, w, b):
        y = lax.conv_general_dilated(
            v, w, window_strides=(1, 1), padding="SAME",
            dimension_numbers=("NHWC", "HWIO", "NHWC"),
        )
        return y + b.reshape(1, 1, 1, -1)

    h = jnp.maximum(conv(x, w1, b1), 0.0)
    y = conv(h, w2, b2)
    return jnp.transpose(y, (0, 3, 1, 2))


def make_params(C, key):
    """Deterministic synthetic stnet weights (kaiming-ish scaling)."""
    k1, k2, k3, k4 = jax.random.split(key, 4)
    scale = 1.0 / jnp.sqrt(9.0 * C)
    w1 = jax.random.normal(k1, (3, 3, C, C), jnp.float32) * scale
    b1 = jax.random.normal(k2, (C,), jnp.float32) * 0.01
    w2 = jax.random.normal(k3, (3, 3, C, C), jnp.float32) * scale
    b2 = jax.random.normal(k4, (C,), jnp.float32) * 0.01
    return w1, b1, w2, b2


if __name__ == "__main__":
    key = jax.random.PRNGKey(0)
    kx, kp = jax.random.split(key)

    N, C, H, W = 2, 8, 16, 16          # PyTorch-style NCHW input; W*C = 128 (lane-dense)
    x = jax.random.normal(kx, (N, C, H, W), jnp.float32)
    params = make_params(C, kp)
    t = jnp.float32(0.0)               # ODE time argument (unused by forward)

    out = ode_func_forward(t, x, params)
    out = jax.block_until_ready(out)

    ref = stnet_reference(x, params)
    assert out.shape == x.shape and out.dtype == x.dtype
    assert jnp.allclose(out, ref, atol=1e-4, rtol=1e-4), "mismatch vs reference"

    print("KERNEL_OK")
</pallas_src>

<mosaic_0001>
module attributes {stable_mosaic.version = 11 : i64} {
  func.func @stnet_kernel(%arg0: i32, %arg1: memref<1x16x128xf32, #tpu.memory_space<vmem>>, %arg2: memref<32x16xf32, #tpu.memory_space<vmem>>, %arg3: memref<3x128x128xf32, #tpu.memory_space<vmem>>, %arg4: memref<1x128xf32, #tpu.memory_space<vmem>>, %arg5: memref<3x128x128xf32, #tpu.memory_space<vmem>>, %arg6: memref<1x128xf32, #tpu.memory_space<vmem>>, %arg7: memref<1x16x128xf32, #tpu.memory_space<vmem>>) attributes {dimension_semantics = [#tpu.dimension_semantics<parallel>], iteration_bounds = array<i64: 2>, scalar_prefetch = 0 : i64, scratch_operands = 0 : i64, tpu.core_type = #tpu.core_type<tc>, window_params = [{transform_indices = @transform_0, window_bounds = array<i64: 1, 16, 128>}, {pipeline_mode = #tpu.pipeline_mode<synchronous>, transform_indices = @transform_1, window_bounds = array<i64: 32, 16>}, {pipeline_mode = #tpu.pipeline_mode<synchronous>, transform_indices = @transform_2, window_bounds = array<i64: 3, 128, 128>}, {pipeline_mode = #tpu.pipeline_mode<synchronous>, transform_indices = @transform_3, window_bounds = array<i64: 1, 128>}, {pipeline_mode = #tpu.pipeline_mode<synchronous>, transform_indices = @transform_4, window_bounds = array<i64: 3, 128, 128>}, {pipeline_mode = #tpu.pipeline_mode<synchronous>, transform_indices = @transform_5, window_bounds = array<i64: 1, 128>}, {transform_indices = @transform_6, window_bounds = array<i64: 1, 16, 128>}]} {
    %c0 = arith.constant 0 : index
    %c0_0 = arith.constant 0 : index
    %c0_1 = arith.constant 0 : index
    %0 = vector.load %arg1[%c0, %c0_0, %c0_1] : memref<1x16x128xf32, #tpu.memory_space<vmem>>, vector<1x16x128xf32>
    %1 = vector.shape_cast %0 : vector<1x16x128xf32> to vector<16x128xf32>
    %c0_2 = arith.constant 0 : index
    %c0_3 = arith.constant 0 : index
    %2 = vector.load %arg2[%c0_2, %c0_3] : memref<32x16xf32, #tpu.memory_space<vmem>>, vector<32x16xf32>
    %cst = arith.constant dense<0.000000e+00> : vector<32x128xf32>
    %3 = tpu.matmul %2, %1, %cst {dimension_numbers = #tpu.dot_dimension_numbers<[1], [0], [0], [1], [0, 0, 1, 1], [], []>} : vector<32x16xf32>, vector<16x128xf32>, vector<32x128xf32> -> vector<32x128xf32>
    %4 = vector.extract_strided_slice %3 {offsets = [0, 0], sizes = [16, 128], strides = [1, 1]} : vector<32x128xf32> to vector<16x128xf32>
    %5 = vector.extract_strided_slice %3 {offsets = [16, 0], sizes = [16, 128], strides = [1, 1]} : vector<32x128xf32> to vector<16x128xf32>
    %c0_4 = arith.constant 0 : index
    %c0_5 = arith.constant 0 : index
    %c0_6 = arith.constant 0 : index
    %6 = vector.load %arg3[%c0_4, %c0_5, %c0_6] : memref<3x128x128xf32, #tpu.memory_space<vmem>>, vector<1x128x128xf32>
    %7 = vector.shape_cast %6 : vector<1x128x128xf32> to vector<128x128xf32>
    %cst_7 = arith.constant dense<0.000000e+00> : vector<16x128xf32>
    %8 = tpu.matmul %4, %7, %cst_7 {dimension_numbers = #tpu.dot_dimension_numbers<[1], [0], [0], [1], [0, 0, 1, 1], [], []>} : vector<16x128xf32>, vector<128x128xf32>, vector<16x128xf32> -> vector<16x128xf32>
    %c1 = arith.constant 1 : index
    %c0_8 = arith.constant 0 : index
    %c0_9 = arith.constant 0 : index
    %9 = vector.load %arg3[%c1, %c0_8, %c0_9] : memref<3x128x128xf32, #tpu.memory_space<vmem>>, vector<1x128x128xf32>
    %10 = vector.shape_cast %9 : vector<1x128x128xf32> to vector<128x128xf32>
    %cst_10 = arith.constant dense<0.000000e+00> : vector<16x128xf32>
    %11 = tpu.matmul %1, %10, %cst_10 {dimension_numbers = #tpu.dot_dimension_numbers<[1], [0], [0], [1], [0, 0, 1, 1], [], []>} : vector<16x128xf32>, vector<128x128xf32>, vector<16x128xf32> -> vector<16x128xf32>
    %12 = arith.addf %8, %11 : vector<16x128xf32>
    %c2 = arith.constant 2 : index
    %c0_11 = arith.constant 0 : index
    %c0_12 = arith.constant 0 : index
    %13 = vector.load %arg3[%c2, %c0_11, %c0_12] : memref<3x128x128xf32, #tpu.memory_space<vmem>>, vector<1x128x128xf32>
    %14 = vector.shape_cast %13 : vector<1x128x128xf32> to vector<128x128xf32>
    %cst_13 = arith.constant dense<0.000000e+00> : vector<16x128xf32>
    %15 = tpu.matmul %5, %14, %cst_13 {dimension_numbers = #tpu.dot_dimension_numbers<[1], [0], [0], [1], [0, 0, 1, 1], [], []>} : vector<16x128xf32>, vector<128x128xf32>, vector<16x128xf32> -> vector<16x128xf32>
    %16 = arith.addf %12, %15 : vector<16x128xf32>
    %c0_14 = arith.constant 0 : index
    %c0_15 = arith.constant 0 : index
    %17 = vector.load %arg4[%c0_14, %c0_15] : memref<1x128xf32, #tpu.memory_space<vmem>>, vector<1x128xf32>
    %18 = vector.broadcast %17 : vector<1x128xf32> to vector<16x128xf32>
    %19 = arith.addf %16, %18 : vector<16x128xf32>
    %cst_16 = arith.constant 0.000000e+00 : f32
    %20 = vector.broadcast %cst_16 : f32 to vector<16x128xf32>
    %21 = arith.maximumf %19, %20 : vector<16x128xf32>
    %cst_17 = arith.constant dense<0.000000e+00> : vector<32x128xf32>
    %22 = tpu.matmul %2, %21, %cst_17 {dimension_numbers = #tpu.dot_dimension_numbers<[1], [0], [0], [1], [0, 0, 1, 1], [], []>} : vector<32x16xf32>, vector<16x128xf32>, vector<32x128xf32> -> vector<32x128xf32>
    %23 = vector.extract_strided_slice %22 {offsets = [0, 0], sizes = [16, 128], strides = [1, 1]} : vector<32x128xf32> to vector<16x128xf32>
    %24 = vector.extract_strided_slice %22 {offsets = [16, 0], sizes = [16, 128], strides = [1, 1]} : vector<32x128xf32> to vector<16x128xf32>
    %c0_18 = arith.constant 0 : index
    %c0_19 = arith.constant 0 : index
    %c0_20 = arith.constant 0 : index
    %25 = vector.load %arg5[%c0_18, %c0_19, %c0_20] : memref<3x128x128xf32, #tpu.memory_space<vmem>>, vector<1x128x128xf32>
    %26 = vector.shape_cast %25 : vector<1x128x128xf32> to vector<128x128xf32>
    %cst_21 = arith.constant dense<0.000000e+00> : vector<16x128xf32>
    %27 = tpu.matmul %23, %26, %cst_21 {dimension_numbers = #tpu.dot_dimension_numbers<[1], [0], [0], [1], [0, 0, 1, 1], [], []>} : vector<16x128xf32>, vector<128x128xf32>, vector<16x128xf32> -> vector<16x128xf32>
    %c1_22 = arith.constant 1 : index
    %c0_23 = arith.constant 0 : index
    %c0_24 = arith.constant 0 : index
    %28 = vector.load %arg5[%c1_22, %c0_23, %c0_24] : memref<3x128x128xf32, #tpu.memory_space<vmem>>, vector<1x128x128xf32>
    %29 = vector.shape_cast %28 : vector<1x128x128xf32> to vector<128x128xf32>
    %cst_25 = arith.constant dense<0.000000e+00> : vector<16x128xf32>
    %30 = tpu.matmul %21, %29, %cst_25 {dimension_numbers = #tpu.dot_dimension_numbers<[1], [0], [0], [1], [0, 0, 1, 1], [], []>} : vector<16x128xf32>, vector<128x128xf32>, vector<16x128xf32> -> vector<16x128xf32>
    %31 = arith.addf %27, %30 : vector<16x128xf32>
    %c2_26 = arith.constant 2 : index
    %c0_27 = arith.constant 0 : index
    %c0_28 = arith.constant 0 : index
    %32 = vector.load %arg5[%c2_26, %c0_27, %c0_28] : memref<3x128x128xf32, #tpu.memory_space<vmem>>, vector<1x128x128xf32>
    %33 = vector.shape_cast %32 : vector<1x128x128xf32> to vector<128x128xf32>
    %cst_29 = arith.constant dense<0.000000e+00> : vector<16x128xf32>
    %34 = tpu.matmul %24, %33, %cst_29 {dimension_numbers = #tpu.dot_dimension_numbers<[1], [0], [0], [1], [0, 0, 1, 1], [], []>} : vector<16x128xf32>, vector<128x128xf32>, vector<16x128xf32> -> vector<16x128xf32>
    %35 = arith.addf %31, %34 : vector<16x128xf32>
    %c0_30 = arith.constant 0 : index
    %c0_31 = arith.constant 0 : index
    %36 = vector.load %arg6[%c0_30, %c0_31] : memref<1x128xf32, #tpu.memory_space<vmem>>, vector<1x128xf32>
    %37 = vector.broadcast %36 : vector<1x128xf32> to vector<16x128xf32>
    %38 = arith.addf %35, %37 : vector<16x128xf32>
    %c0_32 = arith.constant 0 : index
    %c0_33 = arith.constant 0 : index
    %c0_34 = arith.constant 0 : index
    %39 = vector.load %arg7[%c0_32, %c0_33, %c0_34] : memref<1x16x128xf32, #tpu.memory_space<vmem>>, vector<1x16x128xf32>
    %40 = vector.shape_cast %39 : vector<1x16x128xf32> to vector<16x128xf32>
    %41 = vector.shape_cast %38 : vector<16x128xf32> to vector<1x16x128xf32>
    tpu.vector_store %arg7[%c0_32, %c0_33, %c0_34], %41 {strides = array<i32>} : memref<1x16x128xf32, #tpu.memory_space<vmem>>, vector<1x16x128xf32>,
    return
  }
  func.func @transform_0(%arg0: i32) -> (i32, i32, i32) {
    %c0_i32 = arith.constant 0 : i32
    %c0_i32_0 = arith.constant 0 : i32
    %c0_i32_1 = arith.constant 0 : i32
    return %arg0, %c0_i32, %c0_i32_0 : i32, i32, i32
  }
  func.func @transform_1(%arg0: i32) -> (i32, i32) {
    %c0_i32 = arith.constant 0 : i32
    %c0_i32_0 = arith.constant 0 : i32
    %c0_i32_1 = arith.constant 0 : i32
    return %c0_i32, %c0_i32_0 : i32, i32
  }
  func.func @transform_2(%arg0: i32) -> (i32, i32, i32) {
    %c0_i32 = arith.constant 0 : i32
    %c0_i32_0 = arith.constant 0 : i32
    %c0_i32_1 = arith.constant 0 : i32
    %c0_i32_2 = arith.constant 0 : i32
    return %c0_i32, %c0_i32_0, %c0_i32_1 : i32, i32, i32
  }
  func.func @transform_3(%arg0: i32) -> (i32, i32) {
    %c0_i32 = arith.constant 0 : i32
    %c0_i32_0 = arith.constant 0 : i32
    %c0_i32_1 = arith.constant 0 : i32
    return %c0_i32, %c0_i32_0 : i32, i32
  }
  func.func @transform_4(%arg0: i32) -> (i32, i32, i32) {
    %c0_i32 = arith.constant 0 : i32
    %c0_i32_0 = arith.constant 0 : i32
    %c0_i32_1 = arith.constant 0 : i32
    %c0_i32_2 = arith.constant 0 : i32
    return %c0_i32, %c0_i32_0, %c0_i32_1 : i32, i32, i32
  }
  func.func @transform_5(%arg0: i32) -> (i32, i32) {
    %c0_i32 = arith.constant 0 : i32
    %c0_i32_0 = arith.constant 0 : i32
    %c0_i32_1 = arith.constant 0 : i32
    return %c0_i32, %c0_i32_0 : i32, i32
  }
  func.func @transform_6(%arg0: i32) -> (i32, i32, i32) {
    %c0_i32 = arith.constant 0 : i32
    %c0_i32_0 = arith.constant 0 : i32
    %c0_i32_1 = arith.constant 0 : i32
    return %arg0, %c0_i32, %c0_i32_0 : i32, i32, i32
  }
}

</mosaic_0001>

<llo_original>
// kernel: tpu_custom_call.1
$region0: #{tpu_custom_call.1}
  #allocation0 [shape = 'u32[]', space=smem, size = 0x4, offset = 0x4, fixed_abs, tag = 'smem constant byte address 0x4 - core index']
  #allocation1 [shape = 'u32[144,128]{1,0:T(1,128)}', space=vmem, size = 0x12000, scoped, tag = 'internal scratch']
  %s0 = inlined_call_operand.vmem [shape: f32[2,16,128], index: 0, kind: input, shape index: {}]
  %s1 = inlined_call_operand.vmem [shape: f32[32,16], index: 1, kind: input, shape index: {}]
  %s2 = inlined_call_operand.hbm [shape: f32[3,128,128], index: 2, kind: input, shape index: {}]
  %s3 = inlined_call_operand.vmem [shape: f32[1,128], index: 3, kind: input, shape index: {}]
  %s4 = inlined_call_operand.hbm [shape: f32[3,128,128], index: 4, kind: input, shape index: {}]
  %s5 = inlined_call_operand.vmem [shape: f32[1,128], index: 5, kind: input, shape index: {}]
  %s6 = inlined_call_operand.hbm [shape: f32[2,16,128], index: 6, kind: output, shape index: {}]
  %s7 = sld [smem:[#allocation0]]
  $region65: #{tpu_custom_call.1} parent=0
    _
  %s9 = ssub.s32 1, %s7
  %s10 = scalar_select 0, %s9, %s7
  $region1: #{tpu_custom_call.1} parent=0
    #allocation2 [shape = 'u8[196608]{0}', space=vmem, size = 0x30000, scoped, tag = 'input window, operand 2, single buffered']
    #allocation3 [shape = 's32[2]{0}', space=sflag, size = 0x8, scoped, tag = 'scoped memory for tpu_custom_call.1']
    #allocation4 [shape = 's32[2]{0}', space=sflag, size = 0x8, scoped, tag = 'scoped memory for tpu_custom_call.1']
    #allocation5 [shape = 'u8[196608]{0}', space=vmem, size = 0x30000, scoped, tag = 'input window, operand 4, single buffered']
    #allocation6 [shape = 's32[1]{0}', space=sflag, size = 0x4, scoped, tag = 'scoped memory for tpu_custom_call.1']
    #allocation7 [shape = 'u8[16384]{0}', space=vmem, size = 0x4000, scoped, tag = 'output window, operand 0']
    %11 = vsyncpa [#allocation3], 0
    %12 = vsyncpa [#allocation6], 0
    %13 = vsyncpa [#allocation4], 0
    %s14 = scalar_lea.sflag [#allocation4], 1
    %15 = vsyncpa %s14, 0
    loop: start=0, step=1, limit=4
    $region2: #{tpu_custom_call.1} parent=1 // loop_pre_header
      _
    $region3: #{tpu_custom_call.1} parent=1 // loop_header
      %s17 = sphi 0, %s21
      %p18 = scmp.ge.s32.totalorder %s17, 4
      %s27 = sphi 0, %s29
      %s30 = sphi 0, %s27
      %s31 = sphi 0, %s30
      %s47 = sphi 0, %s31
      %s51 = sphi 0, %s51
      %s53 = sphi 0, %s51
      %s54 = sphi 0, %s53
      %s68 = sphi 0, %s54
      %s72 = sphi 0, %s72
      %s74 = sphi 0, %s72
      %s75 = sphi 0, %s74
      %s89 = sphi 0, %s75
      %s93 = sphi 0, %s93
      %s95 = sphi 0, %s93
      %s96 = sphi 0, %s95
      %s110 = sphi 0, %s96
      %s114 = sphi 0, %s114
      %s116 = sphi 0, %s114
      %s117 = sphi 0, %s116
      %s131 = sphi 0, %s117
      %s135 = sphi 0, %s135
      %s137 = sphi 0, %s135
      %s138 = sphi 0, %s137
      %s152 = sphi 0, %s138
      %s158 = sphi 0, %s160
      %s161 = sphi 0, %s158
      %s162 = sphi 0, %s161
      %s178 = sphi 0, %s162
    $region4: #{tpu_custom_call.1} parent=1 // loop_header_branch
      %20 = sbr.rel (%p18) target = $region8
    $region5: #{tpu_custom_call.1} parent=1 // loop_body
      %s22 = ssub.s32 %s17, 1
      %s23 = ssub.s32 %s17, 2
      %s24 = sadd.s32 %s17, 1
      %s25 = ssub.s32 %s17, %s24
      %p26 = scmp.eq.s32.totalorder %s25, 0
      %s28 = sadd.s32 %s27, 1
      %s29 = scalar_select %p26, %s27, %s28
      %p32 = pneg %p26
      %p33 = scmp.eq.s32.totalorder %s17, 1
      %p34 = por %p32, %p33
      %p35 = scmp.ne.s32.totalorder %s27, %s30
      %p36 = scmp.eq.s32.totalorder %s17, 0
      %p37 = por %p35, %p36
      %p38 = scmp.ne.s32.totalorder %s27, %s30
      %p39 = scmp.eq.s32.totalorder %s22, 1
      %p40 = por %p38, %p39
      %p41 = scmp.ne.s32.totalorder %s30, %s31
      %p42 = scmp.eq.s32.totalorder %s22, 0
      %p43 = por %p41, %p42
      %p44 = scmp.ne.s32.totalorder %s30, %s31
      %p45 = scmp.eq.s32.totalorder %s23, 1
      %p46 = por %p44, %p45
      %p48 = scmp.ne.s32.totalorder %s31, %s47
      %p49 = scmp.eq.s32.totalorder %s23, 0
      %p50 = por %p48, %p49
      %s52 = sadd.s32 %s51, 1
      %p55 = scmp.eq.s32.totalorder %s17, 1
      %p56 = scmp.ne.s32.totalorder %s51, %s53
      %p57 = scmp.eq.s32.totalorder %s17, 0
      %p58 = por %p56, %p57
      %p59 = scmp.ne.s32.totalorder %s51, %s53
      %p60 = scmp.eq.s32.totalorder %s22, 1
      %p61 = por %p59, %p60
      %p62 = scmp.ne.s32.totalorder %s53, %s54
      %p63 = scmp.eq.s32.totalorder %s22, 0
      %p64 = por %p62, %p63
      %p65 = scmp.ne.s32.totalorder %s53, %s54
      %p66 = scmp.eq.s32.totalorder %s23, 1
      %p67 = por %p65, %p66
      %p69 = scmp.ne.s32.totalorder %s54, %s68
      %p70 = scmp.eq.s32.totalorder %s23, 0
      %p71 = por %p69, %p70
      %s73 = sadd.s32 %s72, 1
      %p76 = scmp.eq.s32.totalorder %s17, 1
      %p77 = scmp.ne.s32.totalorder %s72, %s74
      %p78 = scmp.eq.s32.totalorder %s17, 0
      %p79 = por %p77, %p78
      %p80 = scmp.ne.s32.totalorder %s72, %s74
      %p81 = scmp.eq.s32.totalorder %s22, 1
      %p82 = por %p80, %p81
      %p83 = scmp.ne.s32.totalorder %s74, %s75
      %p84 = scmp.eq.s32.totalorder %s22, 0
      %p85 = por %p83, %p84
      %p86 = scmp.ne.s32.totalorder %s74, %s75
      %p87 = scmp.eq.s32.totalorder %s23, 1
      %p88 = por %p86, %p87
      %p90 = scmp.ne.s32.totalorder %s75, %s89
      %p91 = scmp.eq.s32.totalorder %s23, 0
      %p92 = por %p90, %p91
      %s94 = sadd.s32 %s93, 1
      %p97 = scmp.eq.s32.totalorder %s17, 1
      %p98 = scmp.ne.s32.totalorder %s93, %s95
      %p99 = scmp.eq.s32.totalorder %s17, 0
      %p100 = por %p98, %p99
      %p101 = scmp.ne.s32.totalorder %s93, %s95
      %p102 = scmp.eq.s32.totalorder %s22, 1
      %p103 = por %p101, %p102
      %p104 = scmp.ne.s32.totalorder %s95, %s96
      %p105 = scmp.eq.s32.totalorder %s22, 0
      %p106 = por %p104, %p105
      %p107 = scmp.ne.s32.totalorder %s95, %s96
      %p108 = scmp.eq.s32.totalorder %s23, 1
      %p109 = por %p107, %p108
      %p111 = scmp.ne.s32.totalorder %s96, %s110
      %p112 = scmp.eq.s32.totalorder %s23, 0
      %p113 = por %p111, %p112
      %s115 = sadd.s32 %s114, 1
      %p118 = scmp.eq.s32.totalorder %s17, 1
      %p119 = scmp.ne.s32.totalorder %s114, %s116
      %p120 = scmp.eq.s32.totalorder %s17, 0
      %p121 = por %p119, %p120
      %p122 = scmp.ne.s32.totalorder %s114, %s116
      %p123 = scmp.eq.s32.totalorder %s22, 1
      %p124 = por %p122, %p123
      %p125 = scmp.ne.s32.totalorder %s116, %s117
      %p126 = scmp.eq.s32.totalorder %s22, 0
      %p127 = por %p125, %p126
      %p128 = scmp.ne.s32.totalorder %s116, %s117
      %p129 = scmp.eq.s32.totalorder %s23, 1
      %p130 = por %p128, %p129
      %p132 = scmp.ne.s32.totalorder %s117, %s131
      %p133 = scmp.eq.s32.totalorder %s23, 0
      %p134 = por %p132, %p133
      %s136 = sadd.s32 %s135, 1
      %p139 = scmp.eq.s32.totalorder %s17, 1
      %p140 = scmp.ne.s32.totalorder %s135, %s137
      %p141 = scmp.eq.s32.totalorder %s17, 0
      %p142 = por %p140, %p141
      %p143 = scmp.ne.s32.totalorder %s135, %s137
      %p144 = scmp.eq.s32.totalorder %s22, 1
      %p145 = por %p143, %p144
      %p146 = scmp.ne.s32.totalorder %s137, %s138
      %p147 = scmp.eq.s32.totalorder %s22, 0
      %p148 = por %p146, %p147
      %p149 = scmp.ne.s32.totalorder %s137, %s138
      %p150 = scmp.eq.s32.totalorder %s23, 1
      %p151 = por %p149, %p150
      %p153 = scmp.ne.s32.totalorder %s138, %s152
      %p154 = scmp.eq.s32.totalorder %s23, 0
      %p155 = por %p153, %p154
      %s156 = ssub.s32 %s17, %s24
      %p157 = scmp.eq.s32.totalorder %s156, 0
      %s159 = sadd.s32 %s158, 1
      %s160 = scalar_select %p157, %s158, %s159
      %p163 = pneg %p157
      %p164 = scmp.eq.s32.totalorder %s17, 1
      %p165 = por %p163, %p164
      %p166 = scmp.ne.s32.totalorder %s158, %s161
      %p167 = scmp.eq.s32.totalorder %s17, 0
      %p168 = por %p166, %p167
      %p169 = scmp.ne.s32.totalorder %s158, %s161
      %p170 = scmp.eq.s32.totalorder %s22, 1
      %p171 = por %p169, %p170
      %p172 = scmp.ne.s32.totalorder %s161, %s162
      %p173 = scmp.eq.s32.totalorder %s22, 0
      %p174 = por %p172, %p173
      %p175 = scmp.ne.s32.totalorder %s161, %s162
      %p176 = scmp.eq.s32.totalorder %s23, 1
      %p177 = por %p175, %p176
      %p179 = scmp.ne.s32.totalorder %s162, %s178
      %p180 = scmp.eq.s32.totalorder %s23, 0
      %p181 = por %p179, %p180
      %p182 = scmp.le.s32.totalorder 1, %s17
      %p183 = scmp.lt.s32.totalorder %s17, 3
      %p184 = pnand %p182, %p183
      %p185 = pneg %p184
      // Predicated region
      $region9: #{tpu_custom_call.1} parent=5 // pred_check
        _
      $region10: #{tpu_custom_call.1} parent=5 // pred_check_branch
        %187 = sbr.rel (%p184) target = $region12
      $region11: #{tpu_custom_call.1} parent=5 // pred_region
        %s188 = ssub.s32 %s17, 1
        // Predicated region
        $region13: #{tpu_custom_call.1} parent=11 // pred_check
          %p189 = pneg %p64
        $region14: #{tpu_custom_call.1} parent=11 // pred_check_branch
          %191 = sbr.rel (%p189) target = $region16
        $region15: #{tpu_custom_call.1} parent=11 // pred_region
          _
        $region16: #{tpu_custom_call.1} parent=11 // pred_fallthru
          _
        // Predicated region
        $region17: #{tpu_custom_call.1} parent=11 // pred_check
          %p192 = pneg %p85
        $region18: #{tpu_custom_call.1} parent=11 // pred_check_branch
          %194 = sbr.rel (%p192) target = $region20
        $region19: #{tpu_custom_call.1} parent=11 // pred_region
          %s196 = ssub.s32 6144, 6144
          %197 = vsyncadd [#allocation3], %s196
          %s198 = sshll.u32 [#allocation2], 4
          %s199 = int_to_ptr.vmem [resolvable:$true] %s198
          %204 = dma.hbm_to_vmem [thread:$0]  %s2, 6144, %s199, [#allocation3], 128, 128, 8
        $region20: #{tpu_custom_call.1} parent=11 // pred_fallthru
          _
        // Predicated region
        $region21: #{tpu_custom_call.1} parent=11 // pred_check
          %p205 = pneg %p106
        $region22: #{tpu_custom_call.1} parent=11 // pred_check_branch
          %207 = sbr.rel (%p205) target = $region24
        $region23: #{tpu_custom_call.1} parent=11 // pred_region
          _
        $region24: #{tpu_custom_call.1} parent=11 // pred_fallthru
          _
        // Predicated region
        $region25: #{tpu_custom_call.1} parent=11 // pred_check
          %p208 = pneg %p127
        $region26: #{tpu_custom_call.1} parent=11 // pred_check_branch
          %210 = sbr.rel (%p208) target = $region28
        $region27: #{tpu_custom_call.1} parent=11 // pred_region
          %s212 = ssub.s32 6144, 6144
          %213 = vsyncadd [#allocation6], %s212
          %s214 = sshll.u32 [#allocation5], 4
          %s215 = int_to_ptr.vmem [resolvable:$true] %s214
          %220 = dma.hbm_to_vmem [thread:$0]  %s4, 6144, %s215, [#allocation6], 128, 128, 8
        $region28: #{tpu_custom_call.1} parent=11 // pred_fallthru
          _
        // Predicated region
        $region29: #{tpu_custom_call.1} parent=11 // pred_check
          %p221 = pneg %p148
        $region30: #{tpu_custom_call.1} parent=11 // pred_check_branch
          %223 = sbr.rel (%p221) target = $region32
        $region31: #{tpu_custom_call.1} parent=11 // pred_region
          _
        $region32: #{tpu_custom_call.1} parent=11 // pred_fallthru
          _
      $region12: #{tpu_custom_call.1} parent=5 // pred_fallthru
        _
      %p224 = scmp.lt.s32.totalorder %s17, 2
      // Predicated region
      $region33: #{tpu_custom_call.1} parent=5 // pred_check
        %p225 = pneg %p224
      $region34: #{tpu_custom_call.1} parent=5 // pred_check_branch
        %227 = sbr.rel (%p225) target = $region36
      $region35: #{tpu_custom_call.1} parent=5 // pred_region
        // Predicated region
        $region37: #{tpu_custom_call.1} parent=35 // pred_check
          %p228 = pneg %p37
        $region38: #{tpu_custom_call.1} parent=35 // pred_check_branch
          %230 = sbr.rel (%p228) target = $region40
        $region39: #{tpu_custom_call.1} parent=35 // pred_region
          %p231 = scmp.lt.s32.totalorder %s17, 1
          %s232 = scalar_select %p231, %s17, 1
          %s233 = smul.addr %s232, 2
          %s234 = smul.addr %s233, 8
          %s235 = scalar_lea.vmem %s0, %s234
        $region40: #{tpu_custom_call.1} parent=35 // pred_fallthru
          _
      $region36: #{tpu_custom_call.1} parent=5 // pred_fallthru
        _
      %p236 = scmp.le.s32.totalorder 1, %s17
      %p237 = scmp.lt.s32.totalorder %s17, 3
      %p238 = pnand %p236, %p237
      %p239 = pneg %p238
      // Predicated region
      $region41: #{tpu_custom_call.1} parent=5 // pred_check
        _
      $region42: #{tpu_custom_call.1} parent=5 // pred_check_branch
        %241 = sbr.rel (%p238) target = $region44
      $region43: #{tpu_custom_call.1} parent=5 // pred_region
        %s242 = ssub.s32 %s17, 1
        // Predicated region
        $region45: #{tpu_custom_call.1} parent=43 // pred_check
          %p243 = pneg %p85
        $region46: #{tpu_custom_call.1} parent=43 // pred_check_branch
          %245 = sbr.rel (%p243) target = $region48
        $region47: #{tpu_custom_call.1} parent=43 // pred_region
          %246 = dma.done [#allocation3], 6144
        $region48: #{tpu_custom_call.1} parent=43 // pred_fallthru
          _
        // Predicated region
        $region49: #{tpu_custom_call.1} parent=43 // pred_check
          %p247 = pneg %p127
        $region50: #{tpu_custom_call.1} parent=43 // pred_check_branch
          %249 = sbr.rel (%p247) target = $region52
        $region51: #{tpu_custom_call.1} parent=43 // pred_region
          %250 = dma.done [#allocation6], 6144
        $region52: #{tpu_custom_call.1} parent=43 // pred_fallthru
          _
        %p251 = scmp.lt.s32.totalorder %s22, 1
        %s252 = scalar_select %p251, %s22, 1
        %s253 = smul.addr %s252, 2
        %s254 = smul.addr %s253, 8
        %s255 = scalar_lea.vmem %s0, %s254
        %p256 = pneg %p43
        %p257 = pneg %p40
        %p258 = pneg %p64
        %p259 = pneg %p61
        %p260 = pneg %p85
        %p261 = pneg %p82
        %p262 = pneg %p106
        %p263 = pneg %p103
        %p264 = pneg %p127
        %p265 = pneg %p124
        %p266 = pneg %p148
        %p267 = pneg %p145
        %p268 = pneg %p174
        %p269 = pneg %p171
        %s270 = sand.u32 %s161, 1
        %s271 = scalar_lea.sflag [#allocation4], %s270
        %s272 = sand.u32 %s161, 1
        %s273 = smul.addr %s272, 16
        %s274 = scalar_lea.vmem [#allocation7], %s273
        %p275 = scmp.lt.s32.totalorder %s22, 1
        %s276 = scalar_select %p275, %s22, 1
        %s277 = smul.addr %s276, 2
        %s278 = smul.addr %s277, 8
        %s279 = scalar_lea.vmem %s0, %s278
        %v280 = vld [vmem:[%s279] sm:$0xff]
        %v281 = vld [vmem:[%s279 + $0x8] sm:$0xff]
        %v282 = vld [vmem:[%s1] sm:$0xff]
        %v283 = vld [vmem:[%s1 + $0x8] sm:$0xff]
        %v284 = vld [vmem:[%s1 + $0x10] sm:$0xff]
        %v285 = vld [vmem:[%s1 + $0x18] sm:$0xff]
        %vm286 = vcmask 130048
        %v288 = vsel %vm286, %v282, 0
        %v291 = vsel %vm286, %v283, 0
        %v294 = vsel %vm286, %v284, 0
        %v297 = vsel %vm286, %v285, 0
        %299 = vmatprep.subr.mxu0 0.0
        %300 = vmatpush1.msra.mxu0 %v280
        %301 = vmatprep.subr.mxu0 0.0
        %302 = vmatpush1.msra.mxu0 %v281
        %303 = vmatprep.subr.mxu0 0.0
        %304 = vmatpush1.msra.mxu0 0.0
        %305 = vmatprep.subr.mxu0 0.0
        %306 = vmatpush1.msra.mxu0 0.0
        %307 = vmatprep.subr.mxu0 0.0
        %308 = vmatpush1.msra.mxu0 0.0
        %309 = vmatprep.subr.mxu0 0.0
        %310 = vmatpush1.msra.mxu0 0.0
        %311 = vmatprep.subr.mxu0 0.0
        %312 = vmatpush1.msra.mxu0 0.0
        %313 = vmatprep.subr.mxu0 0.0
        %314 = vmatpush1.msra.mxu0 0.0
        %315 = vmatprep.subr.mxu0 0.0
        %316 = vmatpush1.msra.mxu0 0.0
        %317 = vmatprep.subr.mxu0 0.0
        %318 = vmatpush1.msra.mxu0 0.0
        %319 = vmatprep.subr.mxu0 0.0
        %320 = vmatpush1.msra.mxu0 0.0
        %321 = vmatprep.subr.mxu0 0.0
        %322 = vmatpush1.msra.mxu0 0.0
        %323 = vmatprep.subr.mxu0 0.0
        %324 = vmatpush1.msra.mxu0 0.0
        %325 = vmatprep.subr.mxu0 0.0
        %326 = vmatpush1.msra.mxu0 0.0
        %327 = vmatprep.subr.mxu0 0.0
        %328 = vmatpush1.msra.mxu0 0.0
        %329 = vmatprep.subr.mxu0 0.0
        %330 = vmatpush1.msra.mxu0 0.0
        %331 = vmatprep.subr.mxu0 0.0
        %332 = vmatpush1.msra.mxu0 0.0
        %333 = vmatprep.subr.mxu0 0.0
        %334 = vmatpush1.msra.mxu0 0.0
        %335 = vmatprep.subr.mxu0 0.0
        %336 = vmatpush1.msra.mxu0 0.0
        %337 = vmatprep.subr.mxu0 0.0
        %338 = vmatpush1.msra.mxu0 0.0
        %339 = vmatprep.subr.mxu0 0.0
        %340 = vmatpush1.msra.mxu0 0.0
        %341 = vmatprep.subr.mxu0 0.0
        %342 = vmatpush1.msra.mxu0 0.0
        %343 = vmatprep.subr.mxu0 0.0
        %344 = vmatpush1.msra.mxu0 0.0
        %345 = vmatprep.subr.mxu0 0.0
        %346 = vmatpush1.msra.mxu0 0.0
        %347 = vmatprep.subr.mxu0 0.0
        %348 = vmatpush1.msra.mxu0 0.0
        %349 = vmatprep.subr.mxu0 0.0
        %350 = vmatpush1.msra.mxu0 0.0
        %351 = vmatprep.subr.mxu0 0.0
        %352 = vmatpush1.msra.mxu0 0.0
        %353 = vmatprep.subr.mxu0 0.0
        %354 = vmatpush1.msra.mxu0 0.0
        %355 = vmatprep.subr.mxu0 0.0
        %356 = vmatpush1.msra.mxu0 0.0
        %357 = vmatprep.subr.mxu0 0.0
        %358 = vmatpush1.msra.mxu0 0.0
        %359 = vmatprep.subr.mxu0 0.0
        %360 = vmatpush1.msra.mxu0 0.0
        %361 = vmatprep.subr.mxu0 0.0
        %362 = vmatpush1.msra.mxu0 0.0
        %363 = vmatprep.mubr.f32.mxu0 0.0
        %364 = vmatmul.mubr.f32.gmra.mrb[0].mxu0 %v288
        %v365 = vpop.f32.mrb[0].mxu0
        %v366 = vadd.f32 0.0, %v365
        %v367 = vpop.f32.mrb[0].mxu0
        %368 = vmatprep.mubr.f32.mxu0 0.0
        %369 = vmatmul.mubr.f32.gmra.mrb[0].mxu0 %v291
        %v370 = vpop.f32.mrb[0].mxu0
        %v371 = vadd.f32 0.0, %v370
        %v372 = vpop.f32.mrb[0].mxu0
        %373 = vmatprep.mubr.f32.mxu0 0.0
        %374 = vmatmul.mubr.f32.gmra.mrb[0].mxu0 %v294
        %v375 = vpop.f32.mrb[0].mxu0
        %v376 = vadd.f32 0.0, %v375
        %v377 = vpop.f32.mrb[0].mxu0
        %378 = vmatprep.mubr.f32.mxu0 0.0
        %379 = vmatmul.mubr.f32.gmra.mrb[0].mxu0 %v297
        %v380 = vpop.f32.mrb[0].mxu0
        %v381 = vadd.f32 0.0, %v380
        %v382 = vpop.f32.mrb[0].mxu0
        %383 = vdwg.mxu0
        %v384 = vld [vmem:[#allocation2] sm:$0xff]
        %v385 = vld [vmem:[#allocation2 + $0x8] sm:$0xff]
        %v386 = vld [vmem:[#allocation2 + $0x10] sm:$0xff]
        %v387 = vld [vmem:[#allocation2 + $0x18] sm:$0xff]
        %v388 = vld [vmem:[#allocation2 + $0x20] sm:$0xff]
        %v389 = vld [vmem:[#allocation2 + $0x28] sm:$0xff]
        %v390 = vld [vmem:[#allocation2 + $0x30] sm:$0xff]
        %v391 = vld [vmem:[#allocation2 + $0x38] sm:$0xff]
        %v392 = vld [vmem:[#allocation2 + $0x40] sm:$0xff]
        %v393 = vld [vmem:[#allocation2 + $0x48] sm:$0xff]
        %v394 = vld [vmem:[#allocation2 + $0x50] sm:$0xff]
        %v395 = vld [vmem:[#allocation2 + $0x58] sm:$0xff]
        %v396 = vld [vmem:[#allocation2 + $0x60] sm:$0xff]
        %v397 = vld [vmem:[#allocation2 + $0x68] sm:$0xff]
        %v398 = vld [vmem:[#allocation2 + $0x70] sm:$0xff]
        %v399 = vld [vmem:[#allocation2 + $0x78] sm:$0xff]
        %s400 = scalar_lea.vmem [#allocation2], 128
        %v401 = vld [vmem:[%s400] sm:$0xff]
        %v402 = vld [vmem:[%s400 + $0x8] sm:$0xff]
        %v403 = vld [vmem:[%s400 + $0x10] sm:$0xff]
        %v404 = vld [vmem:[%s400 + $0x18] sm:$0xff]
        %v405 = vld [vmem:[%s400 + $0x20] sm:$0xff]
        %v406 = vld [vmem:[%s400 + $0x28] sm:$0xff]
        %v407 = vld [vmem:[%s400 + $0x30] sm:$0xff]
        %v408 = vld [vmem:[%s400 + $0x38] sm:$0xff]
        %v409 = vld [vmem:[%s400 + $0x40] sm:$0xff]
        %v410 = vld [vmem:[%s400 + $0x48] sm:$0xff]
        %v411 = vld [vmem:[%s400 + $0x50] sm:$0xff]
        %v412 = vld [vmem:[%s400 + $0x58] sm:$0xff]
        %v413 = vld [vmem:[%s400 + $0x60] sm:$0xff]
        %v414 = vld [vmem:[%s400 + $0x68] sm:$0xff]
        %v415 = vld [vmem:[%s400 + $0x70] sm:$0xff]
        %v416 = vld [vmem:[%s400 + $0x78] sm:$0xff]
        %417 = vmatprep.subr.mxu0 0.0
        %418 = vmatpush1.msra.mxu0 %v401
        %419 = vmatprep.subr.mxu0 0.0
        %420 = vmatpush1.msra.mxu0 %v402
        %421 = vmatprep.subr.mxu0 0.0
        %422 = vmatpush1.msra.mxu0 %v403
        %423 = vmatprep.subr.mxu0 0.0
        %424 = vmatpush1.msra.mxu0 %v404
        %425 = vmatprep.subr.mxu0 0.0
        %426 = vmatpush1.msra.mxu0 %v405
        %427 = vmatprep.subr.mxu0 0.0
        %428 = vmatpush1.msra.mxu0 %v406
        %429 = vmatprep.subr.mxu0 0.0
        %430 = vmatpush1.msra.mxu0 %v407
        %431 = vmatprep.subr.mxu0 0.0
        %432 = vmatpush1.msra.mxu0 %v408
        %433 = vmatprep.subr.mxu0 0.0
        %434 = vmatpush1.msra.mxu0 %v409
        %435 = vmatprep.subr.mxu0 0.0
        %436 = vmatpush1.msra.mxu0 %v410
        %437 = vmatprep.subr.mxu0 0.0
        %438 = vmatpush1.msra.mxu0 %v411
        %439 = vmatprep.subr.mxu0 0.0
        %440 = vmatpush1.msra.mxu0 %v412
        %441 = vmatprep.subr.mxu0 0.0
        %442 = vmatpush1.msra.mxu0 %v413
        %443 = vmatprep.subr.mxu0 0.0
        %444 = vmatpush1.msra.mxu0 %v414
        %445 = vmatprep.subr.mxu0 0.0
        %446 = vmatpush1.msra.mxu0 %v415
        %447 = vmatprep.subr.mxu0 0.0
        %448 = vmatpush1.msra.mxu0 %v416
        %449 = vmatprep.subr.mxu0 0.0
        %450 = vmatpush1.msra.mxu0 0.0
        %451 = vmatprep.subr.mxu0 0.0
        %452 = vmatpush1.msra.mxu0 0.0
        %453 = vmatprep.subr.mxu0 0.0
        %454 = vmatpush1.msra.mxu0 0.0
        %455 = vmatprep.subr.mxu0 0.0
        %456 = vmatpush1.msra.mxu0 0.0
        %457 = vmatprep.subr.mxu0 0.0
        %458 = vmatpush1.msra.mxu0 0.0
        %459 = vmatprep.subr.mxu0 0.0
        %460 = vmatpush1.msra.mxu0 0.0
        %461 = vmatprep.subr.mxu0 0.0
        %462 = vmatpush1.msra.mxu0 0.0
        %463 = vmatprep.subr.mxu0 0.0
        %464 = vmatpush1.msra.mxu0 0.0
        %465 = vmatprep.subr.mxu0 0.0
        %466 = vmatpush1.msra.mxu0 0.0
        %467 = vmatprep.subr.mxu0 0.0
        %468 = vmatpush1.msra.mxu0 0.0
        %469 = vmatprep.subr.mxu0 0.0
        %470 = vmatpush1.msra.mxu0 0.0
        %471 = vmatprep.subr.mxu0 0.0
        %472 = vmatpush1.msra.mxu0 0.0
        %473 = vmatprep.subr.mxu0 0.0
        %474 = vmatpush1.msra.mxu0 0.0
        %475 = vmatprep.subr.mxu0 0.0
        %476 = vmatpush1.msra.mxu0 0.0
        %477 = vmatprep.subr.mxu0 0.0
        %478 = vmatpush1.msra.mxu0 0.0
        %479 = vmatprep.subr.mxu0 0.0
        %480 = vmatpush1.msra.mxu0 0.0
        %481 = vmatprep.mubr.f32.mxu0 0.0
        %482 = vmatmul.mubr.f32.gmra.mrb[0].mxu0 %v280
        %v483 = vpop.f32.mrb[0].mxu0
        %v484 = vadd.f32 0.0, %v483
        %v485 = vpop.f32.mrb[0].mxu0
        %486 = vmatprep.mubr.f32.mxu0 0.0
        %487 = vmatmul.mubr.f32.gmra.mrb[0].mxu0 %v281
        %v488 = vpop.f32.mrb[0].mxu0
        %v489 = vadd.f32 0.0, %v488
        %v490 = vpop.f32.mrb[0].mxu0
        %491 = vdwg.mxu0
        %492 = vmatprep.subr.mxu0 0.0
        %493 = vmatpush1.msra.mxu0 %v384
        %494 = vmatprep.subr.mxu0 0.0
        %495 = vmatpush1.msra.mxu0 %v385
        %496 = vmatprep.subr.mxu0 0.0
        %497 = vmatpush1.msra.mxu0 %v386
        %498 = vmatprep.subr.mxu0 0.0
        %499 = vmatpush1.msra.mxu0 %v387
        %500 = vmatprep.subr.mxu0 0.0
        %501 = vmatpush1.msra.mxu0 %v388
        %502 = vmatprep.subr.mxu0 0.0
        %503 = vmatpush1.msra.mxu0 %v389
        %504 = vmatprep.subr.mxu0 0.0
        %505 = vmatpush1.msra.mxu0 %v390
        %506 = vmatprep.subr.mxu0 0.0
        %507 = vmatpush1.msra.mxu0 %v391
        %508 = vmatprep.subr.mxu0 0.0
        %509 = vmatpush1.msra.mxu0 %v392
        %510 = vmatprep.subr.mxu0 0.0
        %511 = vmatpush1.msra.mxu0 %v393
        %512 = vmatprep.subr.mxu0 0.0
        %513 = vmatpush1.msra.mxu0 %v394
        %514 = vmatprep.subr.mxu0 0.0
        %515 = vmatpush1.msra.mxu0 %v395
        %516 = vmatprep.subr.mxu0 0.0
        %517 = vmatpush1.msra.mxu0 %v396
        %518 = vmatprep.subr.mxu0 0.0
        %519 = vmatpush1.msra.mxu0 %v397
        %520 = vmatprep.subr.mxu0 0.0
        %521 = vmatpush1.msra.mxu0 %v398
        %522 = vmatprep.subr.mxu0 0.0
        %523 = vmatpush1.msra.mxu0 %v399
        %524 = vmatprep.subr.mxu0 0.0
        %525 = vmatpush1.msra.mxu0 0.0
        %526 = vmatprep.subr.mxu0 0.0
        %527 = vmatpush1.msra.mxu0 0.0
        %528 = vmatprep.subr.mxu0 0.0
        %529 = vmatpush1.msra.mxu0 0.0
        %530 = vmatprep.subr.mxu0 0.0
        %531 = vmatpush1.msra.mxu0 0.0
        %532 = vmatprep.subr.mxu0 0.0
        %533 = vmatpush1.msra.mxu0 0.0
        %534 = vmatprep.subr.mxu0 0.0
        %535 = vmatpush1.msra.mxu0 0.0
        %536 = vmatprep.subr.mxu0 0.0
        %537 = vmatpush1.msra.mxu0 0.0
        %538 = vmatprep.subr.mxu0 0.0
        %539 = vmatpush1.msra.mxu0 0.0
        %540 = vmatprep.subr.mxu0 0.0
        %541 = vmatpush1.msra.mxu0 0.0
        %542 = vmatprep.subr.mxu0 0.0
        %543 = vmatpush1.msra.mxu0 0.0
        %544 = vmatprep.subr.mxu0 0.0
        %545 = vmatpush1.msra.mxu0 0.0
        %546 = vmatprep.subr.mxu0 0.0
        %547 = vmatpush1.msra.mxu0 0.0
        %548 = vmatprep.subr.mxu0 0.0
        %549 = vmatpush1.msra.mxu0 0.0
        %550 = vmatprep.subr.mxu0 0.0
        %551 = vmatpush1.msra.mxu0 0.0
        %552 = vmatprep.subr.mxu0 0.0
        %553 = vmatpush1.msra.mxu0 0.0
        %554 = vmatprep.subr.mxu0 0.0
        %555 = vmatpush1.msra.mxu0 0.0
        %556 = vmatprep.mubr.f32.mxu0 0.0
        %557 = vmatmul.mubr.f32.gmra.mrb[0].mxu0 %v366
        %v558 = vpop.f32.mrb[0].mxu0
        %v559 = vadd.f32 %v484, %v558
        %v560 = vpop.f32.mrb[0].mxu0
        %561 = vmatprep.mubr.f32.mxu0 0.0
        %562 = vmatmul.mubr.f32.gmra.mrb[0].mxu0 %v371
        %v563 = vpop.f32.mrb[0].mxu0
        %v564 = vadd.f32 %v489, %v563
        %v565 = vpop.f32.mrb[0].mxu0
        %566 = vdwg.mxu0
        %s567 = scalar_lea.vmem [#allocation2], 256
        %v568 = vld [vmem:[%s567] sm:$0xff]
        %v569 = vld [vmem:[%s567 + $0x8] sm:$0xff]
        %v570 = vld [vmem:[%s567 + $0x10] sm:$0xff]
        %v571 = vld [vmem:[%s567 + $0x18] sm:$0xff]
        %v572 = vld [vmem:[%s567 + $0x20] sm:$0xff]
        %v573 = vld [vmem:[%s567 + $0x28] sm:$0xff]
        %v574 = vld [vmem:[%s567 + $0x30] sm:$0xff]
        %v575 = vld [vmem:[%s567 + $0x38] sm:$0xff]
        %v576 = vld [vmem:[%s567 + $0x40] sm:$0xff]
        %v577 = vld [vmem:[%s567 + $0x48] sm:$0xff]
        %v578 = vld [vmem:[%s567 + $0x50] sm:$0xff]
        %v579 = vld [vmem:[%s567 + $0x58] sm:$0xff]
        %v580 = vld [vmem:[%s567 + $0x60] sm:$0xff]
        %v581 = vld [vmem:[%s567 + $0x68] sm:$0xff]
        %v582 = vld [vmem:[%s567 + $0x70] sm:$0xff]
        %v583 = vld [vmem:[%s567 + $0x78] sm:$0xff]
        %584 = vmatprep.subr.mxu0 0.0
        %585 = vmatpush1.msra.mxu0 %v568
        %586 = vmatprep.subr.mxu0 0.0
        %587 = vmatpush1.msra.mxu0 %v569
        %588 = vmatprep.subr.mxu0 0.0
        %589 = vmatpush1.msra.mxu0 %v570
        %590 = vmatprep.subr.mxu0 0.0
        %591 = vmatpush1.msra.mxu0 %v571
        %592 = vmatprep.subr.mxu0 0.0
        %593 = vmatpush1.msra.mxu0 %v572
        %594 = vmatprep.subr.mxu0 0.0
        %595 = vmatpush1.msra.mxu0 %v573
        %596 = vmatprep.subr.mxu0 0.0
        %597 = vmatpush1.msra.mxu0 %v574
        %598 = vmatprep.subr.mxu0 0.0
        %599 = vmatpush1.msra.mxu0 %v575
        %600 = vmatprep.subr.mxu0 0.0
        %601 = vmatpush1.msra.mxu0 %v576
        %602 = vmatprep.subr.mxu0 0.0
        %603 = vmatpush1.msra.mxu0 %v577
        %604 = vmatprep.subr.mxu0 0.0
        %605 = vmatpush1.msra.mxu0 %v578
        %606 = vmatprep.subr.mxu0 0.0
        %607 = vmatpush1.msra.mxu0 %v579
        %608 = vmatprep.subr.mxu0 0.0
        %609 = vmatpush1.msra.mxu0 %v580
        %610 = vmatprep.subr.mxu0 0.0
        %611 = vmatpush1.msra.mxu0 %v581
        %612 = vmatprep.subr.mxu0 0.0
        %613 = vmatpush1.msra.mxu0 %v582
        %614 = vmatprep.subr.mxu0 0.0
        %615 = vmatpush1.msra.mxu0 %v583
        %616 = vmatprep.subr.mxu0 0.0
        %617 = vmatpush1.msra.mxu0 0.0
        %618 = vmatprep.subr.mxu0 0.0
        %619 = vmatpush1.msra.mxu0 0.0
        %620 = vmatprep.subr.mxu0 0.0
        %621 = vmatpush1.msra.mxu0 0.0
        %622 = vmatprep.subr.mxu0 0.0
        %623 = vmatpush1.msra.mxu0 0.0
        %624 = vmatprep.subr.mxu0 0.0
        %625 = vmatpush1.msra.mxu0 0.0
        %626 = vmatprep.subr.mxu0 0.0
        %627 = vmatpush1.msra.mxu0 0.0
        %628 = vmatprep.subr.mxu0 0.0
        %629 = vmatpush1.msra.mxu0 0.0
        %630 = vmatprep.subr.mxu0 0.0
        %631 = vmatpush1.msra.mxu0 0.0
        %632 = vmatprep.subr.mxu0 0.0
        %633 = vmatpush1.msra.mxu0 0.0
        %634 = vmatprep.subr.mxu0 0.0
        %635 = vmatpush1.msra.mxu0 0.0
        %636 = vmatprep.subr.mxu0 0.0
        %637 = vmatpush1.msra.mxu0 0.0
        %638 = vmatprep.subr.mxu0 0.0
        %639 = vmatpush1.msra.mxu0 0.0
        %640 = vmatprep.subr.mxu0 0.0
        %641 = vmatpush1.msra.mxu0 0.0
        %642 = vmatprep.subr.mxu0 0.0
        %643 = vmatpush1.msra.mxu0 0.0
        %644 = vmatprep.subr.mxu0 0.0
        %645 = vmatpush1.msra.mxu0 0.0
        %646 = vmatprep.subr.mxu0 0.0
        %647 = vmatpush1.msra.mxu0 0.0
        %648 = vmatprep.mubr.f32.mxu0 0.0
        %649 = vmatmul.mubr.f32.gmra.mrb[0].mxu0 %v376
        %v650 = vpop.f32.mrb[0].mxu0
        %v651 = vadd.f32 0.0, %v650
        %v652 = vpop.f32.mrb[0].mxu0
        %653 = vmatprep.mubr.f32.mxu0 0.0
        %654 = vmatmul.mubr.f32.gmra.mrb[0].mxu0 %v381
        %v655 = vpop.f32.mrb[0].mxu0
        %v656 = vadd.f32 0.0, %v655
        %v657 = vpop.f32.mrb[0].mxu0
        %658 = vdwg.mxu0
        %v659 = vadd.f32 %v559, %v651
        %v660 = vadd.f32 %v564, %v656
        %v661 = vld [vmem:[%s3] sm:$0x1]
        %v663 = vlaneseq
        %v664 = vshrl.u32 %v663, 7
        %v665 = vsub.s32 0, %v664
        %v666 = vrot.slane %v661, %v665
        %v668 = vadd.f32 %v659, %v666
        %v669 = vadd.f32 %v660, %v666
        %v670 = vmax.f32 %v668, 0.0
        %v671 = vmax.f32 %v669, 0.0
        %672 = vmatprep.subr.mxu0 0.0
        %673 = vmatpush1.msra.mxu0 %v670
        %674 = vmatprep.subr.mxu0 0.0
        %675 = vmatpush1.msra.mxu0 %v671
        %676 = vmatprep.subr.mxu0 0.0
        %677 = vmatpush1.msra.mxu0 0.0
        %678 = vmatprep.subr.mxu0 0.0
        %679 = vmatpush1.msra.mxu0 0.0
        %680 = vmatprep.subr.mxu0 0.0
        %681 = vmatpush1.msra.mxu0 0.0
        %682 = vmatprep.subr.mxu0 0.0
        %683 = vmatpush1.msra.mxu0 0.0
        %684 = vmatprep.subr.mxu0 0.0
        %685 = vmatpush1.msra.mxu0 0.0
        %686 = vmatprep.subr.mxu0 0.0
        %687 = vmatpush1.msra.mxu0 0.0
        %688 = vmatprep.subr.mxu0 0.0
        %689 = vmatpush1.msra.mxu0 0.0
        %690 = vmatprep.subr.mxu0 0.0
        %691 = vmatpush1.msra.mxu0 0.0
        %692 = vmatprep.subr.mxu0 0.0
        %693 = vmatpush1.msra.mxu0 0.0
        %694 = vmatprep.subr.mxu0 0.0
        %695 = vmatpush1.msra.mxu0 0.0
        %696 = vmatprep.subr.mxu0 0.0
        %697 = vmatpush1.msra.mxu0 0.0
        %698 = vmatprep.subr.mxu0 0.0
        %699 = vmatpush1.msra.mxu0 0.0
        %700 = vmatprep.subr.mxu0 0.0
        %701 = vmatpush1.msra.mxu0 0.0
        %702 = vmatprep.subr.mxu0 0.0
        %703 = vmatpush1.msra.mxu0 0.0
        %704 = vmatprep.subr.mxu0 0.0
        %705 = vmatpush1.msra.mxu0 0.0
        %706 = vmatprep.subr.mxu0 0.0
        %707 = vmatpush1.msra.mxu0 0.0
        %708 = vmatprep.subr.mxu0 0.0
        %709 = vmatpush1.msra.mxu0 0.0
        %710 = vmatprep.subr.mxu0 0.0
        %711 = vmatpush1.msra.mxu0 0.0
        %712 = vmatprep.subr.mxu0 0.0
        %713 = vmatpush1.msra.mxu0 0.0
        %714 = vmatprep.subr.mxu0 0.0
        %715 = vmatpush1.msra.mxu0 0.0
        %716 = vmatprep.subr.mxu0 0.0
        %717 = vmatpush1.msra.mxu0 0.0
        %718 = vmatprep.subr.mxu0 0.0
        %719 = vmatpush1.msra.mxu0 0.0
        %720 = vmatprep.subr.mxu0 0.0
        %721 = vmatpush1.msra.mxu0 0.0
        %722 = vmatprep.subr.mxu0 0.0
        %723 = vmatpush1.msra.mxu0 0.0
        %724 = vmatprep.subr.mxu0 0.0
        %725 = vmatpush1.msra.mxu0 0.0
        %726 = vmatprep.subr.mxu0 0.0
        %727 = vmatpush1.msra.mxu0 0.0
        %728 = vmatprep.subr.mxu0 0.0
        %729 = vmatpush1.msra.mxu0 0.0
        %730 = vmatprep.subr.mxu0 0.0
        %731 = vmatpush1.msra.mxu0 0.0
        %732 = vmatprep.subr.mxu0 0.0
        %733 = vmatpush1.msra.mxu0 0.0
        %734 = vmatprep.subr.mxu0 0.0
        %735 = vmatpush1.msra.mxu0 0.0
        %736 = vmatprep.mubr.f32.mxu0 0.0
        %737 = vmatmul.mubr.f32.gmra.mrb[0].mxu0 %v288
        %v738 = vpop.f32.mrb[0].mxu0
        %v739 = vadd.f32 0.0, %v738
        %v740 = vpop.f32.mrb[0].mxu0
        %741 = vmatprep.mubr.f32.mxu0 0.0
        %742 = vmatmul.mubr.f32.gmra.mrb[0].mxu0 %v291
        %v743 = vpop.f32.mrb[0].mxu0
        %v744 = vadd.f32 0.0, %v743
        %v745 = vpop.f32.mrb[0].mxu0
        %746 = vmatprep.mubr.f32.mxu0 0.0
        %747 = vmatmul.mubr.f32.gmra.mrb[0].mxu0 %v294
        %v748 = vpop.f32.mrb[0].mxu0
        %v749 = vadd.f32 0.0, %v748
        %v750 = vpop.f32.mrb[0].mxu0
        %751 = vmatprep.mubr.f32.mxu0 0.0
        %752 = vmatmul.mubr.f32.gmra.mrb[0].mxu0 %v297
        %v753 = vpop.f32.mrb[0].mxu0
        %v754 = vadd.f32 0.0, %v753
        %v755 = vpop.f32.mrb[0].mxu0
        %756 = vdwg.mxu0
        %v757 = vld [vmem:[#allocation5] sm:$0xff]
        %v758 = vld [vmem:[#allocation5 + $0x8] sm:$0xff]
        %v759 = vld [vmem:[#allocation5 + $0x10] sm:$0xff]
        %v760 = vld [vmem:[#allocation5 + $0x18] sm:$0xff]
        %v761 = vld [vmem:[#allocation5 + $0x20] sm:$0xff]
        %v762 = vld [vmem:[#allocation5 + $0x28] sm:$0xff]
        %v763 = vld [vmem:[#allocation5 + $0x30] sm:$0xff]
        %v764 = vld [vmem:[#allocation5 + $0x38] sm:$0xff]
        %v765 = vld [vmem:[#allocation5 + $0x40] sm:$0xff]
        %v766 = vld [vmem:[#allocation5 + $0x48] sm:$0xff]
        %v767 = vld [vmem:[#allocation5 + $0x50] sm:$0xff]
        %v768 = vld [vmem:[#allocation5 + $0x58] sm:$0xff]
        %v769 = vld [vmem:[#allocation5 + $0x60] sm:$0xff]
        %v770 = vld [vmem:[#allocation5 + $0x68] sm:$0xff]
        %v771 = vld [vmem:[#allocation5 + $0x70] sm:$0xff]
        %v772 = vld [vmem:[#allocation5 + $0x78] sm:$0xff]
        %s773 = scalar_lea.vmem [#allocation5], 128
        %v774 = vld [vmem:[%s773] sm:$0xff]
        %v775 = vld [vmem:[%s773 + $0x8] sm:$0xff]
        %v776 = vld [vmem:[%s773 + $0x10] sm:$0xff]
        %v777 = vld [vmem:[%s773 + $0x18] sm:$0xff]
        %v778 = vld [vmem:[%s773 + $0x20] sm:$0xff]
        %v779 = vld [vmem:[%s773 + $0x28] sm:$0xff]
        %v780 = vld [vmem:[%s773 + $0x30] sm:$0xff]
        %v781 = vld [vmem:[%s773 + $0x38] sm:$0xff]
        %v782 = vld [vmem:[%s773 + $0x40] sm:$0xff]
        %v783 = vld [vmem:[%s773 + $0x48] sm:$0xff]
        %v784 = vld [vmem:[%s773 + $0x50] sm:$0xff]
        %v785 = vld [vmem:[%s773 + $0x58] sm:$0xff]
        %v786 = vld [vmem:[%s773 + $0x60] sm:$0xff]
        %v787 = vld [vmem:[%s773 + $0x68] sm:$0xff]
        %v788 = vld [vmem:[%s773 + $0x70] sm:$0xff]
        %v789 = vld [vmem:[%s773 + $0x78] sm:$0xff]
        %790 = vmatprep.subr.mxu0 0.0
        %791 = vmatpush1.msra.mxu0 %v774
        %792 = vmatprep.subr.mxu0 0.0
        %793 = vmatpush1.msra.mxu0 %v775
        %794 = vmatprep.subr.mxu0 0.0
        %795 = vmatpush1.msra.mxu0 %v776
        %796 = vmatprep.subr.mxu0 0.0
        %797 = vmatpush1.msra.mxu0 %v777
        %798 = vmatprep.subr.mxu0 0.0
        %799 = vmatpush1.msra.mxu0 %v778
        %800 = vmatprep.subr.mxu0 0.0
        %801 = vmatpush1.msra.mxu0 %v779
        %802 = vmatprep.subr.mxu0 0.0
        %803 = vmatpush1.msra.mxu0 %v780
        %804 = vmatprep.subr.mxu0 0.0
        %805 = vmatpush1.msra.mxu0 %v781
        %806 = vmatprep.subr.mxu0 0.0
        %807 = vmatpush1.msra.mxu0 %v782
        %808 = vmatprep.subr.mxu0 0.0
        %809 = vmatpush1.msra.mxu0 %v783
        %810 = vmatprep.subr.mxu0 0.0
        %811 = vmatpush1.msra.mxu0 %v784
        %812 = vmatprep.subr.mxu0 0.0
        %813 = vmatpush1.msra.mxu0 %v785
        %814 = vmatprep.subr.mxu0 0.0
        %815 = vmatpush1.msra.mxu0 %v786
        %816 = vmatprep.subr.mxu0 0.0
        %817 = vmatpush1.msra.mxu0 %v787
        %818 = vmatprep.subr.mxu0 0.0
        %819 = vmatpush1.msra.mxu0 %v788
        %820 = vmatprep.subr.mxu0 0.0
        %821 = vmatpush1.msra.mxu0 %v789
        %822 = vmatprep.subr.mxu0 0.0
        %823 = vmatpush1.msra.mxu0 0.0
        %824 = vmatprep.subr.mxu0 0.0
        %825 = vmatpush1.msra.mxu0 0.0
        %826 = vmatprep.subr.mxu0 0.0
        %827 = vmatpush1.msra.mxu0 0.0
        %828 = vmatprep.subr.mxu0 0.0
        %829 = vmatpush1.msra.mxu0 0.0
        %830 = vmatprep.subr.mxu0 0.0
        %831 = vmatpush1.msra.mxu0 0.0
        %832 = vmatprep.subr.mxu0 0.0
        %833 = vmatpush1.msra.mxu0 0.0
        %834 = vmatprep.subr.mxu0 0.0
        %835 = vmatpush1.msra.mxu0 0.0
        %836 = vmatprep.subr.mxu0 0.0
        %837 = vmatpush1.msra.mxu0 0.0
        %838 = vmatprep.subr.mxu0 0.0
        %839 = vmatpush1.msra.mxu0 0.0
        %840 = vmatprep.subr.mxu0 0.0
        %841 = vmatpush1.msra.mxu0 0.0
        %842 = vmatprep.subr.mxu0 0.0
        %843 = vmatpush1.msra.mxu0 0.0
        %844 = vmatprep.subr.mxu0 0.0
        %845 = vmatpush1.msra.mxu0 0.0
        %846 = vmatprep.subr.mxu0 0.0
        %847 = vmatpush1.msra.mxu0 0.0
        %848 = vmatprep.subr.mxu0 0.0
        %849 = vmatpush1.msra.mxu0 0.0
        %850 = vmatprep.subr.mxu0 0.0
        %851 = vmatpush1.msra.mxu0 0.0
        %852 = vmatprep.subr.mxu0 0.0
        %853 = vmatpush1.msra.mxu0 0.0
        %854 = vmatprep.mubr.f32.mxu0 0.0
        %855 = vmatmul.mubr.f32.gmra.mrb[0].mxu0 %v670
        %v856 = vpop.f32.mrb[0].mxu0
        %v857 = vadd.f32 0.0, %v856
        %v858 = vpop.f32.mrb[0].mxu0
        %859 = vmatprep.mubr.f32.mxu0 0.0
        %860 = vmatmul.mubr.f32.gmra.mrb[0].mxu0 %v671
        %v861 = vpop.f32.mrb[0].mxu0
        %v862 = vadd.f32 0.0, %v861
        %v863 = vpop.f32.mrb[0].mxu0
        %864 = vdwg.mxu0
        %865 = vmatprep.subr.mxu0 0.0
        %866 = vmatpush1.msra.mxu0 %v757
        %867 = vmatprep.subr.mxu0 0.0
        %868 = vmatpush1.msra.mxu0 %v758
        %869 = vmatprep.subr.mxu0 0.0
        %870 = vmatpush1.msra.mxu0 %v759
        %871 = vmatprep.subr.mxu0 0.0
        %872 = vmatpush1.msra.mxu0 %v760
        %873 = vmatprep.subr.mxu0 0.0
        %874 = vmatpush1.msra.mxu0 %v761
        %875 = vmatprep.subr.mxu0 0.0
        %876 = vmatpush1.msra.mxu0 %v762
        %877 = vmatprep.subr.mxu0 0.0
        %878 = vmatpush1.msra.mxu0 %v763
        %879 = vmatprep.subr.mxu0 0.0
        %880 = vmatpush1.msra.mxu0 %v764
        %881 = vmatprep.subr.mxu0 0.0
        %882 = vmatpush1.msra.mxu0 %v765
        %883 = vmatprep.subr.mxu0 0.0
        %884 = vmatpush1.msra.mxu0 %v766
        %885 = vmatprep.subr.mxu0 0.0
        %886 = vmatpush1.msra.mxu0 %v767
        %887 = vmatprep.subr.mxu0 0.0
        %888 = vmatpush1.msra.mxu0 %v768
        %889 = vmatprep.subr.mxu0 0.0
        %890 = vmatpush1.msra.mxu0 %v769
        %891 = vmatprep.subr.mxu0 0.0
        %892 = vmatpush1.msra.mxu0 %v770
        %893 = vmatprep.subr.mxu0 0.0
        %894 = vmatpush1.msra.mxu0 %v771
        %895 = vmatprep.subr.mxu0 0.0
        %896 = vmatpush1.msra.mxu0 %v772
        %897 = vmatprep.subr.mxu0 0.0
        %898 = vmatpush1.msra.mxu0 0.0
        %899 = vmatprep.subr.mxu0 0.0
        %900 = vmatpush1.msra.mxu0 0.0
        %901 = vmatprep.subr.mxu0 0.0
        %902 = vmatpush1.msra.mxu0 0.0
        %903 = vmatprep.subr.mxu0 0.0
        %904 = vmatpush1.msra.mxu0 0.0
        %905 = vmatprep.subr.mxu0 0.0
        %906 = vmatpush1.msra.mxu0 0.0
        %907 = vmatprep.subr.mxu0 0.0
        %908 = vmatpush1.msra.mxu0 0.0
        %909 = vmatprep.subr.mxu0 0.0
        %910 = vmatpush1.msra.mxu0 0.0
        %911 = vmatprep.subr.mxu0 0.0
        %912 = vmatpush1.msra.mxu0 0.0
        %913 = vmatprep.subr.mxu0 0.0
        %914 = vmatpush1.msra.mxu0 0.0
        %915 = vmatprep.subr.mxu0 0.0
        %916 = vmatpush1.msra.mxu0 0.0
        %917 = vmatprep.subr.mxu0 0.0
        %918 = vmatpush1.msra.mxu0 0.0
        %919 = vmatprep.subr.mxu0 0.0
        %920 = vmatpush1.msra.mxu0 0.0
        %921 = vmatprep.subr.mxu0 0.0
        %922 = vmatpush1.msra.mxu0 0.0
        %923 = vmatprep.subr.mxu0 0.0
        %924 = vmatpush1.msra.mxu0 0.0
        %925 = vmatprep.subr.mxu0 0.0
        %926 = vmatpush1.msra.mxu0 0.0
        %927 = vmatprep.subr.mxu0 0.0
        %928 = vmatpush1.msra.mxu0 0.0
        %929 = vmatprep.mubr.f32.mxu0 0.0
        %930 = vmatmul.mubr.f32.gmra.mrb[0].mxu0 %v739
        %v931 = vpop.f32.mrb[0].mxu0
        %v932 = vadd.f32 %v857, %v931
        %v933 = vpop.f32.mrb[0].mxu0
        %934 = vmatprep.mubr.f32.mxu0 0.0
        %935 = vmatmul.mubr.f32.gmra.mrb[0].mxu0 %v744
        %v936 = vpop.f32.mrb[0].mxu0
        %v937 = vadd.f32 %v862, %v936
        %v938 = vpop.f32.mrb[0].mxu0
        %939 = vdwg.mxu0
        %s940 = scalar_lea.vmem [#allocation5], 256
        %v941 = vld [vmem:[%s940] sm:$0xff]
        %v942 = vld [vmem:[%s940 + $0x8] sm:$0xff]
        %v943 = vld [vmem:[%s940 + $0x10] sm:$0xff]
        %v944 = vld [vmem:[%s940 + $0x18] sm:$0xff]
        %v945 = vld [vmem:[%s940 + $0x20] sm:$0xff]
        %v946 = vld [vmem:[%s940 + $0x28] sm:$0xff]
        %v947 = vld [vmem:[%s940 + $0x30] sm:$0xff]
        %v948 = vld [vmem:[%s940 + $0x38] sm:$0xff]
        %v949 = vld [vmem:[%s940 + $0x40] sm:$0xff]
        %v950 = vld [vmem:[%s940 + $0x48] sm:$0xff]
        %v951 = vld [vmem:[%s940 + $0x50] sm:$0xff]
        %v952 = vld [vmem:[%s940 + $0x58] sm:$0xff]
        %v953 = vld [vmem:[%s940 + $0x60] sm:$0xff]
        %v954 = vld [vmem:[%s940 + $0x68] sm:$0xff]
        %v955 = vld [vmem:[%s940 + $0x70] sm:$0xff]
        %v956 = vld [vmem:[%s940 + $0x78] sm:$0xff]
        %957 = vmatprep.subr.mxu0 0.0
        %958 = vmatpush1.msra.mxu0 %v941
        %959 = vmatprep.subr.mxu0 0.0
        %960 = vmatpush1.msra.mxu0 %v942
        %961 = vmatprep.subr.mxu0 0.0
        %962 = vmatpush1.msra.mxu0 %v943
        %963 = vmatprep.subr.mxu0 0.0
        %964 = vmatpush1.msra.mxu0 %v944
        %965 = vmatprep.subr.mxu0 0.0
        %966 = vmatpush1.msra.mxu0 %v945
        %967 = vmatprep.subr.mxu0 0.0
        %968 = vmatpush1.msra.mxu0 %v946
        %969 = vmatprep.subr.mxu0 0.0
        %970 = vmatpush1.msra.mxu0 %v947
        %971 = vmatprep.subr.mxu0 0.0
        %972 = vmatpush1.msra.mxu0 %v948
        %973 = vmatprep.subr.mxu0 0.0
        %974 = vmatpush1.msra.mxu0 %v949
        %975 = vmatprep.subr.mxu0 0.0
        %976 = vmatpush1.msra.mxu0 %v950
        %977 = vmatprep.subr.mxu0 0.0
        %978 = vmatpush1.msra.mxu0 %v951
        %979 = vmatprep.subr.mxu0 0.0
        %980 = vmatpush1.msra.mxu0 %v952
        %981 = vmatprep.subr.mxu0 0.0
        %982 = vmatpush1.msra.mxu0 %v953
        %983 = vmatprep.subr.mxu0 0.0
        %984 = vmatpush1.msra.mxu0 %v954
        %985 = vmatprep.subr.mxu0 0.0
        %986 = vmatpush1.msra.mxu0 %v955
        %987 = vmatprep.subr.mxu0 0.0
        %988 = vmatpush1.msra.mxu0 %v956
        %989 = vmatprep.subr.mxu0 0.0
        %990 = vmatpush1.msra.mxu0 0.0
        %991 = vmatprep.subr.mxu0 0.0
        %992 = vmatpush1.msra.mxu0 0.0
        %993 = vmatprep.subr.mxu0 0.0
        %994 = vmatpush1.msra.mxu0 0.0
        %995 = vmatprep.subr.mxu0 0.0
        %996 = vmatpush1.msra.mxu0 0.0
        %997 = vmatprep.subr.mxu0 0.0
        %998 = vmatpush1.msra.mxu0 0.0
        %999 = vmatprep.subr.mxu0 0.0
        %1000 = vmatpush1.msra.mxu0 0.0
        %1001 = vmatprep.subr.mxu0 0.0
        %1002 = vmatpush1.msra.mxu0 0.0
        %1003 = vmatprep.subr.mxu0 0.0
        %1004 = vmatpush1.msra.mxu0 0.0
        %1005 = vmatprep.subr.mxu0 0.0
        %1006 = vmatpush1.msra.mxu0 0.0
        %1007 = vmatprep.subr.mxu0 0.0
        %1008 = vmatpush1.msra.mxu0 0.0
        %1009 = vmatprep.subr.mxu0 0.0
        %1010 = vmatpush1.msra.mxu0 0.0
        %1011 = vmatprep.subr.mxu0 0.0
        %1012 = vmatpush1.msra.mxu0 0.0
        %1013 = vmatprep.subr.mxu0 0.0
        %1014 = vmatpush1.msra.mxu0 0.0
        %1015 = vmatprep.subr.mxu0 0.0
        %1016 = vmatpush1.msra.mxu0 0.0
        %1017 = vmatprep.subr.mxu0 0.0
        %1018 = vmatpush1.msra.mxu0 0.0
        %1019 = vmatprep.subr.mxu0 0.0
        %1020 = vmatpush1.msra.mxu0 0.0
        %1021 = vmatprep.mubr.f32.mxu0 0.0
        %1022 = vmatmul.mubr.f32.gmra.mrb[0].mxu0 %v749
        %v1023 = vpop.f32.mrb[0].mxu0
        %v1024 = vadd.f32 0.0, %v1023
        %v1025 = vpop.f32.mrb[0].mxu0
        %1026 = vmatprep.mubr.f32.mxu0 0.0
        %1027 = vmatmul.mubr.f32.gmra.mrb[0].mxu0 %v754
        %v1028 = vpop.f32.mrb[0].mxu0
        %v1029 = vadd.f32 0.0, %v1028
        %v1030 = vpop.f32.mrb[0].mxu0
        %1031 = vdwg.mxu0
        %v1032 = vadd.f32 %v932, %v1024
        %v1033 = vadd.f32 %v937, %v1029
        %v1034 = vld [vmem:[%s5] sm:$0x1]
        %v1036 = vlaneseq
        %v1037 = vshrl.u32 %v1036, 7
        %v1038 = vsub.s32 0, %v1037
        %v1039 = vrot.slane %v1034, %v1038
        %v1041 = vadd.f32 %v1032, %v1039
        %v1042 = vadd.f32 %v1033, %v1039
        %1043 = vst [vmem:[%s274] sm:$0xff] %v1041
        %1044 = vst [vmem:[%s274 + $0x8] sm:$0xff] %v1042
        %s1045 = sand.u32 %s161, 1
        %s1046 = scalar_lea.sflag [#allocation4], %s1045
        %s1047 = sand.u32 %s161, 1
        %s1048 = smul.addr %s1047, 16
        %s1049 = scalar_lea.vmem [#allocation7], %s1048
        // Predicated region
        $region53: #{tpu_custom_call.1} parent=43 // pred_check
          %p1050 = pneg %p171
        $region54: #{tpu_custom_call.1} parent=43 // pred_check_branch
          %1052 = sbr.rel (%p1050) target = $region56
        $region55: #{tpu_custom_call.1} parent=43 // pred_region
          %s1054 = ssub.s32 256, 256
          %1055 = vsyncadd %s1046, %s1054
          %s1056 = smul.addr %s22, 2
          %s1057 = smul.addr %s1056, 128
          %s1058 = scalar_lea.hbm %s6, %s1057
          %s1059 = sshll.u32 %s1049, 4
          %s1060 = int_to_ptr.vmem [resolvable:$true] %s1059
          %1065 = dma.vmem_to_hbm [thread:$0]  %s1060, 256, %s1058, %s1046, 128, 128, 8
        $region56: #{tpu_custom_call.1} parent=43 // pred_fallthru
          _
      $region44: #{tpu_custom_call.1} parent=5 // pred_fallthru
        _
      %p1066 = scmp.le.s32.totalorder 2, %s17
      // Predicated region
      $region57: #{tpu_custom_call.1} parent=5 // pred_check
        %p1067 = pneg %p1066
      $region58: #{tpu_custom_call.1} parent=5 // pred_check_branch
        %1069 = sbr.rel (%p1067) target = $region60
      $region59: #{tpu_custom_call.1} parent=5 // pred_region
        %s1070 = ssub.s32 %s17, 2
        // Predicated region
        $region61: #{tpu_custom_call.1} parent=59 // pred_check
          %p1071 = pneg %p177
        $region62: #{tpu_custom_call.1} parent=59 // pred_check_branch
          %1073 = sbr.rel (%p1071) target = $region64
        $region63: #{tpu_custom_call.1} parent=59 // pred_region
          %s1074 = sand.u32 %s162, 1
          %s1075 = scalar_lea.sflag [#allocation4], %s1074
          %s1076 = sand.u32 %s162, 1
          %s1077 = smul.addr %s1076, 16
          %s1078 = scalar_lea.vmem [#allocation7], %s1077
          %1079 = dma.done %s1075, 256
        $region64: #{tpu_custom_call.1} parent=59 // pred_fallthru
          _
      $region60: #{tpu_custom_call.1} parent=5 // pred_fallthru
        _
    $region6: #{tpu_custom_call.1} parent=1 // loop_footer
      %s21 = sadd.s32 1, %s17
    $region7: #{tpu_custom_call.1} parent=1 // loop_footer_branch
      %16 = sbr.rel target = $region3
    $region8: #{tpu_custom_call.1} parent=1 // loop_exit
      _
    %1080 = vsyncpa [#allocation3], 1
    %s1081 = scalar_lea.sflag [#allocation3], 1
    %1082 = vsyncpa %s1081, 1
    %1083 = vsyncpa [#allocation6], 1
    %1084 = vsyncpa [#allocation4], 1
    %s1085 = scalar_lea.sflag [#allocation4], 1
    %1086 = vsyncpa %s1085, 1

</llo_original>
